<compile_context>
chip_gen: v7x
topology: tpu7x:2x2x1
jax: 0.10.0
libtpu: 0.0.40
codegen_flags: <defaults>
</compile_context>

<pallas_src>
import numpy as np

import jax
import jax.numpy as jnp
from jax.experimental import pallas as pl
from jax.experimental.pallas import tpu as pltpu


# ----------------------------------------------------------------------------
# Module hyper-parameters (stand-ins for model_parameters / channel_parameters)
# ----------------------------------------------------------------------------
MODEL_PARAMETERS = dict(m=16, n_channel=8, k=4, seed=0, n_user=2, r=4.0 / 8.0)
CHANNEL_PARAMETERS = dict(channel_type="awgn", ebno=7.0, channel_k=1, channel_taps=None)


# ----------------------------------------------------------------------------
# Pallas kernel: full fused forward (encoder -> batchnorm -> AWGN -> decoder)
# ----------------------------------------------------------------------------
def _autoencoder_kernel(
    x_ref, noise_ref,
    w1_ref, b1_ref, w2_ref, b2_ref,
    mc1_ref, bc1_ref, mc2_ref, bc2_ref, mc3_ref, bc3_ref, mc4_ref, bc4_ref,
    w3_ref, b3_ref, w4_ref, b4_ref,
    wd1_ref, bd1_ref, wd2_ref, bd2_ref,
    out_ref,
):
    f32 = jnp.float32

    def dense(h, w_ref, b_ref):
        # (B, in) @ (in, out) + (1, out) — MXU matmul, f32 accumulation.
        return jnp.dot(h, w_ref[...], preferred_element_type=f32) + b_ref[...]

    def elu(h):
        # nn.ELU(alpha=1.0)
        return jnp.where(h > 0, h, jnp.exp(h) - 1.0)

    x = x_ref[...].astype(f32)

    # ---- Encoder -----------------------------------------------------------
    h = elu(dense(x, w1_ref, b1_ref))          # Linear(m, m) + ELU
    h = elu(dense(h, w2_ref, b2_ref))          # Linear(m, 2n) + ELU
    # Unflatten(1,(1,-1)) + Conv1d stack, lowered to exact dense matmuls on
    # the channel-major flattened activation (valid conv == Toeplitz matmul).
    h = jnp.tanh(dense(h, mc1_ref, bc1_ref))   # Conv1d(1, n, 2, 1)  + Tanh
    h = jnp.tanh(dense(h, mc2_ref, bc2_ref))   # Conv1d(n, n, 4, 2)  + Tanh
    h = jnp.tanh(dense(h, mc3_ref, bc3_ref))   # Conv1d(n, n, 2, 1)  + Tanh
    h = jnp.tanh(dense(h, mc4_ref, bc4_ref))   # Conv1d(n, n, 2, 1)  + Tanh
    h = jnp.tanh(dense(h, w3_ref, b3_ref))     # Flatten + Linear(.., 4n) + Tanh
    e = dense(h, w4_ref, b4_ref)               # Linear(4n, 2n)

    # BatchNorm1d(2n, affine=False) — training-mode batch stats, biased var.
    mean = jnp.mean(e, axis=0, keepdims=True)
    var = jnp.mean((e - mean) ** 2, axis=0, keepdims=True)
    e = (e - mean) * jax.lax.rsqrt(var + 1e-5)

    # ---- AWGN channel ------------------------------------------------------
    c = e + noise_ref[...]                     # noise pre-scaled by 1/sqrt(2*r*ebno)

    # ---- Decoder -----------------------------------------------------------
    d = jnp.tanh(dense(c, wd1_ref, bd1_ref))
    out_ref[...] = dense(d, wd2_ref, bd2_ref).astype(out_ref.dtype)


def wireless_autoencoder_forward(x, noise, params):
    """Pallas equivalent of Wireless_Autoencoder.forward (awgn channel)."""
    batch = x.shape[0]
    m = MODEL_PARAMETERS["m"]
    args = (x, noise) + tuple(params)

    vmem_spec = pl.BlockSpec(memory_space=pltpu.MemorySpace.VMEM)
    return pl.pallas_call(
        _autoencoder_kernel,
        out_shape=jax.ShapeDtypeStruct((batch, m), jnp.float32),
        in_specs=[vmem_spec] * len(args),
        out_specs=vmem_spec,
    )(*args)


# ----------------------------------------------------------------------------
# Host-side parameter construction (PyTorch-style default init) and the exact
# dense (Toeplitz) lowering of each Conv1d layer.
# ----------------------------------------------------------------------------
def _linear_init(key, fan_in, fan_out):
    kw, kb = jax.random.split(key)
    bound = 1.0 / np.sqrt(fan_in)
    w = jax.random.uniform(kw, (fan_in, fan_out), jnp.float32, -bound, bound)
    b = jax.random.uniform(kb, (1, fan_out), jnp.float32, -bound, bound)
    return w, b


def _conv1d_init(key, c_in, c_out, k):
    kw, kb = jax.random.split(key)
    bound = 1.0 / np.sqrt(c_in * k)
    w = jax.random.uniform(kw, (c_out, c_in, k), jnp.float32, -bound, bound)
    b = jax.random.uniform(kb, (c_out,), jnp.float32, -bound, bound)
    return w, b


def _conv1d_to_dense(w, b, l_in, stride):
    """Exact dense-matrix equivalent of a valid (no-pad) Conv1d on the
    channel-major flattened activation: (B, c_in*l_in) @ M -> (B, c_out*l_out)."""
    c_out, c_in, k = w.shape
    l_out = (l_in - k) // stride + 1
    co, ci, kk, lo = np.meshgrid(
        np.arange(c_out), np.arange(c_in), np.arange(k), np.arange(l_out),
        indexing="ij")
    rows = (ci * l_in + lo * stride + kk).reshape(-1)
    cols = (co * l_out + lo).reshape(-1)
    vals = w[co.reshape(-1), ci.reshape(-1), kk.reshape(-1)]
    mat = jnp.zeros((c_in * l_in, c_out * l_out), jnp.float32).at[rows, cols].set(vals)
    b_eff = jnp.repeat(b, l_out).reshape(1, c_out * l_out)
    return mat, b_eff, l_out


def init_params(key, m, n_channel):
    cd = 2 * n_channel  # compressed_dimension after the in-__init__ doubling
    keys = jax.random.split(key, 10)

    w1, b1 = _linear_init(keys[0], m, m)
    w2, b2 = _linear_init(keys[1], m, cd)

    cw1, cb1 = _conv1d_init(keys[2], 1, n_channel, 2)
    mc1, bc1, l1 = _conv1d_to_dense(cw1, cb1, cd, 1)
    k2 = 4 if n_channel > 4 else 2
    cw2, cb2 = _conv1d_init(keys[3], n_channel, n_channel, k2)
    mc2, bc2, l2 = _conv1d_to_dense(cw2, cb2, l1, 2)
    cw3, cb3 = _conv1d_init(keys[4], n_channel, n_channel, 2)
    mc3, bc3, l3 = _conv1d_to_dense(cw3, cb3, l2, 1)
    cw4, cb4 = _conv1d_init(keys[5], n_channel, n_channel, 2)
    mc4, bc4, l4 = _conv1d_to_dense(cw4, cb4, l3, 1)

    flat = n_channel * l4
    assert flat == max(n_channel - 4, 1) * n_channel  # matches the module spec

    w3, b3 = _linear_init(keys[6], flat, cd * 2)
    w4, b4 = _linear_init(keys[7], cd * 2, cd)

    # Placeholder dense decoder (architecture commented out in the source).
    wd1, bd1 = _linear_init(keys[8], cd, cd * 2)
    wd2, bd2 = _linear_init(keys[9], cd * 2, m)

    return (w1, b1, w2, b2, mc1, bc1, mc2, bc2, mc3, bc3, mc4, bc4,
            w3, b3, w4, b4, wd1, bd1, wd2, bd2)


# ----------------------------------------------------------------------------
# Pure-JAX reference (same math) for correctness validation.
# ----------------------------------------------------------------------------
def _reference_forward(x, noise, params):
    (w1, b1, w2, b2, mc1, bc1, mc2, bc2, mc3, bc3, mc4, bc4,
     w3, b3, w4, b4, wd1, bd1, wd2, bd2) = params
    hi = jax.lax.Precision.HIGHEST

    def dense(h, w, b):
        return jnp.dot(h, w, precision=hi) + b

    def elu(h):
        return jnp.where(h > 0, h, jnp.exp(h) - 1.0)

    h = elu(dense(x, w1, b1))
    h = elu(dense(h, w2, b2))
    h = jnp.tanh(dense(h, mc1, bc1))
    h = jnp.tanh(dense(h, mc2, bc2))
    h = jnp.tanh(dense(h, mc3, bc3))
    h = jnp.tanh(dense(h, mc4, bc4))
    h = jnp.tanh(dense(h, w3, b3))
    e = dense(h, w4, b4)
    mean = jnp.mean(e, axis=0, keepdims=True)
    var = jnp.mean((e - mean) ** 2, axis=0, keepdims=True)
    e = (e - mean) * jax.lax.rsqrt(var + 1e-5)
    c = e + noise
    d = jnp.tanh(dense(c, wd1, bd1))
    return dense(d, wd2, bd2)


# ----------------------------------------------------------------------------
if __name__ == "__main__":
    key = jax.random.PRNGKey(0)
    k_msg, k_params, k_noise = jax.random.split(key, 3)

    m = MODEL_PARAMETERS["m"]
    n_channel = MODEL_PARAMETERS["n_channel"]
    cd = 2 * n_channel
    batch = 8

    # One-hot messages, the usual input of the wireless autoencoder.
    labels = jax.random.randint(k_msg, (batch,), 0, m)
    x = jax.nn.one_hot(labels, m, dtype=jnp.float32)

    params = init_params(k_params, m, n_channel)

    # AWGN noise, pre-scaled like the module: randn / sqrt(2 * r * ebno_lin).
    r = MODEL_PARAMETERS["r"]
    ebno_lin = 10.0 ** (CHANNEL_PARAMETERS["ebno"] / 10.0)
    noise = jax.random.normal(k_noise, (batch, cd), jnp.float32) / np.sqrt(2.0 * r * ebno_lin)

    y = wireless_autoencoder_forward(x, noise, params)
    y = jax.block_until_ready(y)

    assert y.shape == (batch, m)
    assert bool(jnp.all(jnp.isfinite(y)))

    y_ref = _reference_forward(x, noise, params)
    assert bool(jnp.allclose(y, y_ref, rtol=1e-3, atol=1e-3)), "mismatch vs JAX reference"

    print("KERNEL_OK")
</pallas_src>

<mosaic_0001>
module attributes {stable_mosaic.version = 11 : i64} {
  func.func @_autoencoder_kernel(%arg0: memref<8x16xf32, #tpu.memory_space<vmem>>, %arg1: memref<8x16xf32, #tpu.memory_space<vmem>>, %arg2: memref<16x16xf32, #tpu.memory_space<vmem>>, %arg3: memref<1x16xf32, #tpu.memory_space<vmem>>, %arg4: memref<16x16xf32, #tpu.memory_space<vmem>>, %arg5: memref<1x16xf32, #tpu.memory_space<vmem>>, %arg6: memref<16x120xf32, #tpu.memory_space<vmem>>, %arg7: memref<1x120xf32, #tpu.memory_space<vmem>>, %arg8: memref<120x48xf32, #tpu.memory_space<vmem>>, %arg9: memref<1x48xf32, #tpu.memory_space<vmem>>, %arg10: memref<48x40xf32, #tpu.memory_space<vmem>>, %arg11: memref<1x40xf32, #tpu.memory_space<vmem>>, %arg12: memref<40x32xf32, #tpu.memory_space<vmem>>, %arg13: memref<1x32xf32, #tpu.memory_space<vmem>>, %arg14: memref<32x32xf32, #tpu.memory_space<vmem>>, %arg15: memref<1x32xf32, #tpu.memory_space<vmem>>, %arg16: memref<32x16xf32, #tpu.memory_space<vmem>>, %arg17: memref<1x16xf32, #tpu.memory_space<vmem>>, %arg18: memref<16x32xf32, #tpu.memory_space<vmem>>, %arg19: memref<1x32xf32, #tpu.memory_space<vmem>>, %arg20: memref<32x16xf32, #tpu.memory_space<vmem>>, %arg21: memref<1x16xf32, #tpu.memory_space<vmem>>, %arg22: memref<8x16xf32, #tpu.memory_space<vmem>>) attributes {dimension_semantics = [], scalar_prefetch = 0 : i64, scratch_operands = 0 : i64, tpu.core_type = #tpu.core_type<tc>} {
    %c0 = arith.constant 0 : index
    %c0_0 = arith.constant 0 : index
    %0 = vector.load %arg0[%c0, %c0_0] : memref<8x16xf32, #tpu.memory_space<vmem>>, vector<8x16xf32>
    %c0_1 = arith.constant 0 : index
    %c0_2 = arith.constant 0 : index
    %1 = vector.load %arg2[%c0_1, %c0_2] : memref<16x16xf32, #tpu.memory_space<vmem>>, vector<16x16xf32>
    %cst = arith.constant dense<0.000000e+00> : vector<8x16xf32>
    %2 = tpu.matmul %0, %1, %cst {dimension_numbers = #tpu.dot_dimension_numbers<[1], [0], [0], [1], [0, 0, 1, 1], [], []>} : vector<8x16xf32>, vector<16x16xf32>, vector<8x16xf32> -> vector<8x16xf32>
    %c0_3 = arith.constant 0 : index
    %c0_4 = arith.constant 0 : index
    %3 = vector.load %arg3[%c0_3, %c0_4] : memref<1x16xf32, #tpu.memory_space<vmem>>, vector<1x16xf32>
    %4 = vector.broadcast %3 : vector<1x16xf32> to vector<8x16xf32>
    %5 = arith.addf %2, %4 : vector<8x16xf32>
    %cst_5 = arith.constant 0.000000e+00 : f32
    %6 = vector.broadcast %cst_5 : f32 to vector<8x16xf32>
    %7 = arith.cmpf ogt, %5, %6 : vector<8x16xf32>
    %8 = math.exp %5 : vector<8x16xf32>
    %cst_6 = arith.constant 1.000000e+00 : f32
    %9 = vector.broadcast %cst_6 : f32 to vector<8x16xf32>
    %10 = arith.subf %8, %9 : vector<8x16xf32>
    %11 = arith.select %7, %5, %10 : vector<8x16xi1>, vector<8x16xf32>
    %c0_7 = arith.constant 0 : index
    %c0_8 = arith.constant 0 : index
    %12 = vector.load %arg4[%c0_7, %c0_8] : memref<16x16xf32, #tpu.memory_space<vmem>>, vector<16x16xf32>
    %cst_9 = arith.constant dense<0.000000e+00> : vector<8x16xf32>
    %13 = tpu.matmul %11, %12, %cst_9 {dimension_numbers = #tpu.dot_dimension_numbers<[1], [0], [0], [1], [0, 0, 1, 1], [], []>} : vector<8x16xf32>, vector<16x16xf32>, vector<8x16xf32> -> vector<8x16xf32>
    %c0_10 = arith.constant 0 : index
    %c0_11 = arith.constant 0 : index
    %14 = vector.load %arg5[%c0_10, %c0_11] : memref<1x16xf32, #tpu.memory_space<vmem>>, vector<1x16xf32>
    %15 = vector.broadcast %14 : vector<1x16xf32> to vector<8x16xf32>
    %16 = arith.addf %13, %15 : vector<8x16xf32>
    %cst_12 = arith.constant 0.000000e+00 : f32
    %17 = vector.broadcast %cst_12 : f32 to vector<8x16xf32>
    %18 = arith.cmpf ogt, %16, %17 : vector<8x16xf32>
    %19 = math.exp %16 : vector<8x16xf32>
    %cst_13 = arith.constant 1.000000e+00 : f32
    %20 = vector.broadcast %cst_13 : f32 to vector<8x16xf32>
    %21 = arith.subf %19, %20 : vector<8x16xf32>
    %22 = arith.select %18, %16, %21 : vector<8x16xi1>, vector<8x16xf32>
    %c0_14 = arith.constant 0 : index
    %c0_15 = arith.constant 0 : index
    %23 = vector.load %arg6[%c0_14, %c0_15] : memref<16x120xf32, #tpu.memory_space<vmem>>, vector<16x120xf32>
    %cst_16 = arith.constant dense<0.000000e+00> : vector<8x120xf32>
    %24 = tpu.matmul %22, %23, %cst_16 {dimension_numbers = #tpu.dot_dimension_numbers<[1], [0], [0], [1], [0, 0, 1, 1], [], []>} : vector<8x16xf32>, vector<16x120xf32>, vector<8x120xf32> -> vector<8x120xf32>
    %c0_17 = arith.constant 0 : index
    %c0_18 = arith.constant 0 : index
    %25 = vector.load %arg7[%c0_17, %c0_18] : memref<1x120xf32, #tpu.memory_space<vmem>>, vector<1x120xf32>
    %26 = vector.broadcast %25 : vector<1x120xf32> to vector<8x120xf32>
    %27 = arith.addf %24, %26 : vector<8x120xf32>
    %28 = math.tanh %27 : vector<8x120xf32>
    %c0_19 = arith.constant 0 : index
    %c0_20 = arith.constant 0 : index
    %29 = vector.load %arg8[%c0_19, %c0_20] : memref<120x48xf32, #tpu.memory_space<vmem>>, vector<120x48xf32>
    %cst_21 = arith.constant dense<0.000000e+00> : vector<8x48xf32>
    %30 = tpu.matmul %28, %29, %cst_21 {dimension_numbers = #tpu.dot_dimension_numbers<[1], [0], [0], [1], [0, 0, 1, 1], [], []>} : vector<8x120xf32>, vector<120x48xf32>, vector<8x48xf32> -> vector<8x48xf32>
    %c0_22 = arith.constant 0 : index
    %c0_23 = arith.constant 0 : index
    %31 = vector.load %arg9[%c0_22, %c0_23] : memref<1x48xf32, #tpu.memory_space<vmem>>, vector<1x48xf32>
    %32 = vector.broadcast %31 : vector<1x48xf32> to vector<8x48xf32>
    %33 = arith.addf %30, %32 : vector<8x48xf32>
    %34 = math.tanh %33 : vector<8x48xf32>
    %c0_24 = arith.constant 0 : index
    %c0_25 = arith.constant 0 : index
    %35 = vector.load %arg10[%c0_24, %c0_25] : memref<48x40xf32, #tpu.memory_space<vmem>>, vector<48x40xf32>
    %cst_26 = arith.constant dense<0.000000e+00> : vector<8x40xf32>
    %36 = tpu.matmul %34, %35, %cst_26 {dimension_numbers = #tpu.dot_dimension_numbers<[1], [0], [0], [1], [0, 0, 1, 1], [], []>} : vector<8x48xf32>, vector<48x40xf32>, vector<8x40xf32> -> vector<8x40xf32>
    %c0_27 = arith.constant 0 : index
    %c0_28 = arith.constant 0 : index
    %37 = vector.load %arg11[%c0_27, %c0_28] : memref<1x40xf32, #tpu.memory_space<vmem>>, vector<1x40xf32>
    %38 = vector.broadcast %37 : vector<1x40xf32> to vector<8x40xf32>
    %39 = arith.addf %36, %38 : vector<8x40xf32>
    %40 = math.tanh %39 : vector<8x40xf32>
    %c0_29 = arith.constant 0 : index
    %c0_30 = arith.constant 0 : index
    %41 = vector.load %arg12[%c0_29, %c0_30] : memref<40x32xf32, #tpu.memory_space<vmem>>, vector<40x32xf32>
    %cst_31 = arith.constant dense<0.000000e+00> : vector<8x32xf32>
    %42 = tpu.matmul %40, %41, %cst_31 {dimension_numbers = #tpu.dot_dimension_numbers<[1], [0], [0], [1], [0, 0, 1, 1], [], []>} : vector<8x40xf32>, vector<40x32xf32>, vector<8x32xf32> -> vector<8x32xf32>
    %c0_32 = arith.constant 0 : index
    %c0_33 = arith.constant 0 : index
    %43 = vector.load %arg13[%c0_32, %c0_33] : memref<1x32xf32, #tpu.memory_space<vmem>>, vector<1x32xf32>
    %44 = vector.broadcast %43 : vector<1x32xf32> to vector<8x32xf32>
    %45 = arith.addf %42, %44 : vector<8x32xf32>
    %46 = math.tanh %45 : vector<8x32xf32>
    %c0_34 = arith.constant 0 : index
    %c0_35 = arith.constant 0 : index
    %47 = vector.load %arg14[%c0_34, %c0_35] : memref<32x32xf32, #tpu.memory_space<vmem>>, vector<32x32xf32>
    %cst_36 = arith.constant dense<0.000000e+00> : vector<8x32xf32>
    %48 = tpu.matmul %46, %47, %cst_36 {dimension_numbers = #tpu.dot_dimension_numbers<[1], [0], [0], [1], [0, 0, 1, 1], [], []>} : vector<8x32xf32>, vector<32x32xf32>, vector<8x32xf32> -> vector<8x32xf32>
    %c0_37 = arith.constant 0 : index
    %c0_38 = arith.constant 0 : index
    %49 = vector.load %arg15[%c0_37, %c0_38] : memref<1x32xf32, #tpu.memory_space<vmem>>, vector<1x32xf32>
    %50 = vector.broadcast %49 : vector<1x32xf32> to vector<8x32xf32>
    %51 = arith.addf %48, %50 : vector<8x32xf32>
    %52 = math.tanh %51 : vector<8x32xf32>
    %c0_39 = arith.constant 0 : index
    %c0_40 = arith.constant 0 : index
    %53 = vector.load %arg16[%c0_39, %c0_40] : memref<32x16xf32, #tpu.memory_space<vmem>>, vector<32x16xf32>
    %cst_41 = arith.constant dense<0.000000e+00> : vector<8x16xf32>
    %54 = tpu.matmul %52, %53, %cst_41 {dimension_numbers = #tpu.dot_dimension_numbers<[1], [0], [0], [1], [0, 0, 1, 1], [], []>} : vector<8x32xf32>, vector<32x16xf32>, vector<8x16xf32> -> vector<8x16xf32>
    %c0_42 = arith.constant 0 : index
    %c0_43 = arith.constant 0 : index
    %55 = vector.load %arg17[%c0_42, %c0_43] : memref<1x16xf32, #tpu.memory_space<vmem>>, vector<1x16xf32>
    %56 = vector.broadcast %55 : vector<1x16xf32> to vector<8x16xf32>
    %57 = arith.addf %54, %56 : vector<8x16xf32>
    %cst_44 = arith.constant dense<0.000000e+00> : vector<16xf32>
    %58 = vector.multi_reduction <add>, %57, %cst_44 [0] : vector<8x16xf32> to vector<16xf32>
    %59 = vector.shape_cast %58 : vector<16xf32> to vector<1x16xf32>
    %cst_45 = arith.constant 8.000000e+00 : f32
    %60 = vector.broadcast %cst_45 : f32 to vector<1x16xf32>
    %61 = arith.divf %59, %60 : vector<1x16xf32>
    %62 = vector.broadcast %61 : vector<1x16xf32> to vector<8x16xf32>
    %63 = arith.subf %57, %62 : vector<8x16xf32>
    %64 = arith.mulf %63, %63 : vector<8x16xf32>
    %cst_46 = arith.constant dense<0.000000e+00> : vector<16xf32>
    %65 = vector.multi_reduction <add>, %64, %cst_46 [0] : vector<8x16xf32> to vector<16xf32>
    %66 = vector.shape_cast %65 : vector<16xf32> to vector<1x16xf32>
    %cst_47 = arith.constant 8.000000e+00 : f32
    %67 = vector.broadcast %cst_47 : f32 to vector<1x16xf32>
    %68 = arith.divf %66, %67 : vector<1x16xf32>
    %69 = vector.broadcast %61 : vector<1x16xf32> to vector<8x16xf32>
    %70 = arith.subf %57, %69 : vector<8x16xf32>
    %cst_48 = arith.constant 9.99999974E-6 : f32
    %71 = vector.broadcast %cst_48 : f32 to vector<1x16xf32>
    %72 = arith.addf %68, %71 : vector<1x16xf32>
    %73 = math.rsqrt %72 : vector<1x16xf32>
    %74 = vector.broadcast %73 : vector<1x16xf32> to vector<8x16xf32>
    %75 = arith.mulf %70, %74 : vector<8x16xf32>
    %c0_49 = arith.constant 0 : index
    %c0_50 = arith.constant 0 : index
    %76 = vector.load %arg1[%c0_49, %c0_50] : memref<8x16xf32, #tpu.memory_space<vmem>>, vector<8x16xf32>
    %77 = arith.addf %75, %76 : vector<8x16xf32>
    %c0_51 = arith.constant 0 : index
    %c0_52 = arith.constant 0 : index
    %78 = vector.load %arg18[%c0_51, %c0_52] : memref<16x32xf32, #tpu.memory_space<vmem>>, vector<16x32xf32>
    %cst_53 = arith.constant dense<0.000000e+00> : vector<8x32xf32>
    %79 = tpu.matmul %77, %78, %cst_53 {dimension_numbers = #tpu.dot_dimension_numbers<[1], [0], [0], [1], [0, 0, 1, 1], [], []>} : vector<8x16xf32>, vector<16x32xf32>, vector<8x32xf32> -> vector<8x32xf32>
    %c0_54 = arith.constant 0 : index
    %c0_55 = arith.constant 0 : index
    %80 = vector.load %arg19[%c0_54, %c0_55] : memref<1x32xf32, #tpu.memory_space<vmem>>, vector<1x32xf32>
    %81 = vector.broadcast %80 : vector<1x32xf32> to vector<8x32xf32>
    %82 = arith.addf %79, %81 : vector<8x32xf32>
    %83 = math.tanh %82 : vector<8x32xf32>
    %c0_56 = arith.constant 0 : index
    %c0_57 = arith.constant 0 : index
    %84 = vector.load %arg20[%c0_56, %c0_57] : memref<32x16xf32, #tpu.memory_space<vmem>>, vector<32x16xf32>
    %cst_58 = arith.constant dense<0.000000e+00> : vector<8x16xf32>
    %85 = tpu.matmul %83, %84, %cst_58 {dimension_numbers = #tpu.dot_dimension_numbers<[1], [0], [0], [1], [0, 0, 1, 1], [], []>} : vector<8x32xf32>, vector<32x16xf32>, vector<8x16xf32> -> vector<8x16xf32>
    %c0_59 = arith.constant 0 : index
    %c0_60 = arith.constant 0 : index
    %86 = vector.load %arg21[%c0_59, %c0_60] : memref<1x16xf32, #tpu.memory_space<vmem>>, vector<1x16xf32>
    %87 = vector.broadcast %86 : vector<1x16xf32> to vector<8x16xf32>
    %88 = arith.addf %85, %87 : vector<8x16xf32>
    %c0_61 = arith.constant 0 : index
    %c0_62 = arith.constant 0 : index
    %89 = vector.load %arg22[%c0_61, %c0_62] : memref<8x16xf32, #tpu.memory_space<vmem>>, vector<8x16xf32>
    tpu.vector_store %arg22[%c0_61, %c0_62], %88 {strides = array<i32>} : memref<8x16xf32, #tpu.memory_space<vmem>>, vector<8x16xf32>,
    return
  }
}

</mosaic_0001>

<llo_original>
// kernel: tpu_custom_call.1
$region0: #{tpu_custom_call.1}
  #allocation0 [shape = 'u32[]', space=smem, size = 0x4, offset = 0x4, fixed_abs, tag = 'smem constant byte address 0x4 - core index']
  #allocation1 [shape = 'u32[144,128]{1,0:T(1,128)}', space=vmem, size = 0x12000, scoped, tag = 'internal scratch']
  %s0 = inlined_call_operand.vmem [shape: f32[8,16], index: 0, kind: input, shape index: {}]
  %s1 = inlined_call_operand.vmem [shape: f32[8,16], index: 1, kind: input, shape index: {}]
  %s2 = inlined_call_operand.vmem [shape: f32[16,16], index: 2, kind: input, shape index: {}]
  %s3 = inlined_call_operand.vmem [shape: f32[1,16], index: 3, kind: input, shape index: {}]
  %s4 = inlined_call_operand.vmem [shape: f32[16,16], index: 4, kind: input, shape index: {}]
  %s5 = inlined_call_operand.vmem [shape: f32[1,16], index: 5, kind: input, shape index: {}]
  %s6 = inlined_call_operand.vmem [shape: f32[16,120], index: 6, kind: input, shape index: {}]
  %s7 = inlined_call_operand.vmem [shape: f32[1,120], index: 7, kind: input, shape index: {}]
  %s8 = inlined_call_operand.vmem [shape: f32[120,48], index: 8, kind: input, shape index: {}]
  %s9 = inlined_call_operand.vmem [shape: f32[1,48], index: 9, kind: input, shape index: {}]
  %s10 = inlined_call_operand.vmem [shape: f32[48,40], index: 10, kind: input, shape index: {}]
  %s11 = inlined_call_operand.vmem [shape: f32[1,40], index: 11, kind: input, shape index: {}]
  %s12 = inlined_call_operand.vmem [shape: f32[40,32], index: 12, kind: input, shape index: {}]
  %s13 = inlined_call_operand.vmem [shape: f32[1,32], index: 13, kind: input, shape index: {}]
  %s14 = inlined_call_operand.vmem [shape: f32[32,32], index: 14, kind: input, shape index: {}]
  %s15 = inlined_call_operand.vmem [shape: f32[1,32], index: 15, kind: input, shape index: {}]
  %s16 = inlined_call_operand.vmem [shape: f32[32,16], index: 16, kind: input, shape index: {}]
  %s17 = inlined_call_operand.vmem [shape: f32[1,16], index: 17, kind: input, shape index: {}]
  %s18 = inlined_call_operand.vmem [shape: f32[16,32], index: 18, kind: input, shape index: {}]
  %s19 = inlined_call_operand.vmem [shape: f32[1,32], index: 19, kind: input, shape index: {}]
  %s20 = inlined_call_operand.vmem [shape: f32[32,16], index: 20, kind: input, shape index: {}]
  %s21 = inlined_call_operand.vmem [shape: f32[1,16], index: 21, kind: input, shape index: {}]
  %s22 = inlined_call_operand.hbm [shape: f32[8,16], index: 22, kind: output, shape index: {}]
  %s23 = sld [smem:[#allocation0]]
  $region98: #{tpu_custom_call.1} parent=0
    _
  %s25 = ssub.s32 1, %s23
  %s26 = scalar_select 0, %s25, %s23
  $region1: #{tpu_custom_call.1} parent=0
    #allocation2 [shape = 'u8[4096]{0}', space=vmem, size = 0x1000, scoped, tag = 'output window, operand 0, single buffered']
    #allocation3 [shape = 's32[1]{0}', space=sflag, size = 0x4, scoped, tag = 'scoped memory for tpu_custom_call.1']
    %27 = vsyncpa [#allocation3], 0
    // Predicated region
    $region2: #{tpu_custom_call.1} parent=1 // pred_check
      _
    $region3: #{tpu_custom_call.1} parent=1 // pred_check_branch
      %29 = sbr.rel (0) target = $region5
    $region4: #{tpu_custom_call.1} parent=1 // pred_region
      _
    $region5: #{tpu_custom_call.1} parent=1 // pred_fallthru
      _
    // Predicated region
    $region6: #{tpu_custom_call.1} parent=1 // pred_check
      _
    $region7: #{tpu_custom_call.1} parent=1 // pred_check_branch
      %31 = sbr.rel (0) target = $region9
    $region8: #{tpu_custom_call.1} parent=1 // pred_region
      _
    $region9: #{tpu_custom_call.1} parent=1 // pred_fallthru
      _
    // Predicated region
    $region10: #{tpu_custom_call.1} parent=1 // pred_check
      _
    $region11: #{tpu_custom_call.1} parent=1 // pred_check_branch
      %33 = sbr.rel (0) target = $region13
    $region12: #{tpu_custom_call.1} parent=1 // pred_region
      _
    $region13: #{tpu_custom_call.1} parent=1 // pred_fallthru
      _
    // Predicated region
    $region14: #{tpu_custom_call.1} parent=1 // pred_check
      _
    $region15: #{tpu_custom_call.1} parent=1 // pred_check_branch
      %35 = sbr.rel (0) target = $region17
    $region16: #{tpu_custom_call.1} parent=1 // pred_region
      _
    $region17: #{tpu_custom_call.1} parent=1 // pred_fallthru
      _
    // Predicated region
    $region18: #{tpu_custom_call.1} parent=1 // pred_check
      _
    $region19: #{tpu_custom_call.1} parent=1 // pred_check_branch
      %37 = sbr.rel (0) target = $region21
    $region20: #{tpu_custom_call.1} parent=1 // pred_region
      _
    $region21: #{tpu_custom_call.1} parent=1 // pred_fallthru
      _
    // Predicated region
    $region22: #{tpu_custom_call.1} parent=1 // pred_check
      _
    $region23: #{tpu_custom_call.1} parent=1 // pred_check_branch
      %39 = sbr.rel (0) target = $region25
    $region24: #{tpu_custom_call.1} parent=1 // pred_region
      _
    $region25: #{tpu_custom_call.1} parent=1 // pred_fallthru
      _
    // Predicated region
    $region26: #{tpu_custom_call.1} parent=1 // pred_check
      _
    $region27: #{tpu_custom_call.1} parent=1 // pred_check_branch
      %41 = sbr.rel (0) target = $region29
    $region28: #{tpu_custom_call.1} parent=1 // pred_region
      _
    $region29: #{tpu_custom_call.1} parent=1 // pred_fallthru
      _
    // Predicated region
    $region30: #{tpu_custom_call.1} parent=1 // pred_check
      _
    $region31: #{tpu_custom_call.1} parent=1 // pred_check_branch
      %43 = sbr.rel (0) target = $region33
    $region32: #{tpu_custom_call.1} parent=1 // pred_region
      _
    $region33: #{tpu_custom_call.1} parent=1 // pred_fallthru
      _
    // Predicated region
    $region34: #{tpu_custom_call.1} parent=1 // pred_check
      _
    $region35: #{tpu_custom_call.1} parent=1 // pred_check_branch
      %45 = sbr.rel (0) target = $region37
    $region36: #{tpu_custom_call.1} parent=1 // pred_region
      _
    $region37: #{tpu_custom_call.1} parent=1 // pred_fallthru
      _
    // Predicated region
    $region38: #{tpu_custom_call.1} parent=1 // pred_check
      _
    $region39: #{tpu_custom_call.1} parent=1 // pred_check_branch
      %47 = sbr.rel (0) target = $region41
    $region40: #{tpu_custom_call.1} parent=1 // pred_region
      _
    $region41: #{tpu_custom_call.1} parent=1 // pred_fallthru
      _
    // Predicated region
    $region42: #{tpu_custom_call.1} parent=1 // pred_check
      _
    $region43: #{tpu_custom_call.1} parent=1 // pred_check_branch
      %49 = sbr.rel (0) target = $region45
    $region44: #{tpu_custom_call.1} parent=1 // pred_region
      _
    $region45: #{tpu_custom_call.1} parent=1 // pred_fallthru
      _
    // Predicated region
    $region46: #{tpu_custom_call.1} parent=1 // pred_check
      _
    $region47: #{tpu_custom_call.1} parent=1 // pred_check_branch
      %51 = sbr.rel (0) target = $region49
    $region48: #{tpu_custom_call.1} parent=1 // pred_region
      _
    $region49: #{tpu_custom_call.1} parent=1 // pred_fallthru
      _
    // Predicated region
    $region50: #{tpu_custom_call.1} parent=1 // pred_check
      _
    $region51: #{tpu_custom_call.1} parent=1 // pred_check_branch
      %53 = sbr.rel (0) target = $region53
    $region52: #{tpu_custom_call.1} parent=1 // pred_region
      _
    $region53: #{tpu_custom_call.1} parent=1 // pred_fallthru
      _
    // Predicated region
    $region54: #{tpu_custom_call.1} parent=1 // pred_check
      _
    $region55: #{tpu_custom_call.1} parent=1 // pred_check_branch
      %55 = sbr.rel (0) target = $region57
    $region56: #{tpu_custom_call.1} parent=1 // pred_region
      _
    $region57: #{tpu_custom_call.1} parent=1 // pred_fallthru
      _
    // Predicated region
    $region58: #{tpu_custom_call.1} parent=1 // pred_check
      _
    $region59: #{tpu_custom_call.1} parent=1 // pred_check_branch
      %57 = sbr.rel (0) target = $region61
    $region60: #{tpu_custom_call.1} parent=1 // pred_region
      _
    $region61: #{tpu_custom_call.1} parent=1 // pred_fallthru
      _
    // Predicated region
    $region62: #{tpu_custom_call.1} parent=1 // pred_check
      _
    $region63: #{tpu_custom_call.1} parent=1 // pred_check_branch
      %59 = sbr.rel (0) target = $region65
    $region64: #{tpu_custom_call.1} parent=1 // pred_region
      _
    $region65: #{tpu_custom_call.1} parent=1 // pred_fallthru
      _
    // Predicated region
    $region66: #{tpu_custom_call.1} parent=1 // pred_check
      _
    $region67: #{tpu_custom_call.1} parent=1 // pred_check_branch
      %61 = sbr.rel (0) target = $region69
    $region68: #{tpu_custom_call.1} parent=1 // pred_region
      _
    $region69: #{tpu_custom_call.1} parent=1 // pred_fallthru
      _
    // Predicated region
    $region70: #{tpu_custom_call.1} parent=1 // pred_check
      _
    $region71: #{tpu_custom_call.1} parent=1 // pred_check_branch
      %63 = sbr.rel (0) target = $region73
    $region72: #{tpu_custom_call.1} parent=1 // pred_region
      _
    $region73: #{tpu_custom_call.1} parent=1 // pred_fallthru
      _
    // Predicated region
    $region74: #{tpu_custom_call.1} parent=1 // pred_check
      _
    $region75: #{tpu_custom_call.1} parent=1 // pred_check_branch
      %65 = sbr.rel (0) target = $region77
    $region76: #{tpu_custom_call.1} parent=1 // pred_region
      _
    $region77: #{tpu_custom_call.1} parent=1 // pred_fallthru
      _
    // Predicated region
    $region78: #{tpu_custom_call.1} parent=1 // pred_check
      _
    $region79: #{tpu_custom_call.1} parent=1 // pred_check_branch
      %67 = sbr.rel (0) target = $region81
    $region80: #{tpu_custom_call.1} parent=1 // pred_region
      _
    $region81: #{tpu_custom_call.1} parent=1 // pred_fallthru
      _
    // Predicated region
    $region82: #{tpu_custom_call.1} parent=1 // pred_check
      _
    $region83: #{tpu_custom_call.1} parent=1 // pred_check_branch
      %69 = sbr.rel (0) target = $region85
    $region84: #{tpu_custom_call.1} parent=1 // pred_region
      _
    $region85: #{tpu_custom_call.1} parent=1 // pred_fallthru
      _
    // Predicated region
    $region86: #{tpu_custom_call.1} parent=1 // pred_check
      _
    $region87: #{tpu_custom_call.1} parent=1 // pred_check_branch
      %71 = sbr.rel (0) target = $region89
    $region88: #{tpu_custom_call.1} parent=1 // pred_region
      _
    $region89: #{tpu_custom_call.1} parent=1 // pred_fallthru
      _
    %v72 = vld [vmem:[%s0] sm:$0xff]
    %v73 = vld [vmem:[%s2] sm:$0xff]
    %v74 = vld [vmem:[%s2 + $0x8] sm:$0xff]
    %v75 = vld [vmem:[%s3] sm:$0x1]
    %v77 = vlaneseq
    %v78 = vshrl.u32 %v77, 7
    %v79 = vsub.s32 0, %v78
    %v80 = vrot.slane %v75, %v79
    %vm82 = vcmask 130048
    %v84 = vsel %vm82, %v72, 0
    %86 = vmatprep.subr.mxu0 0.0
    %87 = vmatpush1.msra.mxu0 %v73
    %88 = vmatprep.subr.mxu0 0.0
    %89 = vmatpush1.msra.mxu0 %v74
    %90 = vmatprep.subr.mxu0 0.0
    %91 = vmatpush1.msra.mxu0 0.0
    %92 = vmatprep.subr.mxu0 0.0
    %93 = vmatpush1.msra.mxu0 0.0
    %94 = vmatprep.subr.mxu0 0.0
    %95 = vmatpush1.msra.mxu0 0.0
    %96 = vmatprep.subr.mxu0 0.0
    %97 = vmatpush1.msra.mxu0 0.0
    %98 = vmatprep.subr.mxu0 0.0
    %99 = vmatpush1.msra.mxu0 0.0
    %100 = vmatprep.subr.mxu0 0.0
    %101 = vmatpush1.msra.mxu0 0.0
    %102 = vmatprep.subr.mxu0 0.0
    %103 = vmatpush1.msra.mxu0 0.0
    %104 = vmatprep.subr.mxu0 0.0
    %105 = vmatpush1.msra.mxu0 0.0
    %106 = vmatprep.subr.mxu0 0.0
    %107 = vmatpush1.msra.mxu0 0.0
    %108 = vmatprep.subr.mxu0 0.0
    %109 = vmatpush1.msra.mxu0 0.0
    %110 = vmatprep.subr.mxu0 0.0
    %111 = vmatpush1.msra.mxu0 0.0
    %112 = vmatprep.subr.mxu0 0.0
    %113 = vmatpush1.msra.mxu0 0.0
    %114 = vmatprep.subr.mxu0 0.0
    %115 = vmatpush1.msra.mxu0 0.0
    %116 = vmatprep.subr.mxu0 0.0
    %117 = vmatpush1.msra.mxu0 0.0
    %118 = vmatprep.subr.mxu0 0.0
    %119 = vmatpush1.msra.mxu0 0.0
    %120 = vmatprep.subr.mxu0 0.0
    %121 = vmatpush1.msra.mxu0 0.0
    %122 = vmatprep.subr.mxu0 0.0
    %123 = vmatpush1.msra.mxu0 0.0
    %124 = vmatprep.subr.mxu0 0.0
    %125 = vmatpush1.msra.mxu0 0.0
    %126 = vmatprep.subr.mxu0 0.0
    %127 = vmatpush1.msra.mxu0 0.0
    %128 = vmatprep.subr.mxu0 0.0
    %129 = vmatpush1.msra.mxu0 0.0
    %130 = vmatprep.subr.mxu0 0.0
    %131 = vmatpush1.msra.mxu0 0.0
    %132 = vmatprep.subr.mxu0 0.0
    %133 = vmatpush1.msra.mxu0 0.0
    %134 = vmatprep.subr.mxu0 0.0
    %135 = vmatpush1.msra.mxu0 0.0
    %136 = vmatprep.subr.mxu0 0.0
    %137 = vmatpush1.msra.mxu0 0.0
    %138 = vmatprep.subr.mxu0 0.0
    %139 = vmatpush1.msra.mxu0 0.0
    %140 = vmatprep.subr.mxu0 0.0
    %141 = vmatpush1.msra.mxu0 0.0
    %142 = vmatprep.subr.mxu0 0.0
    %143 = vmatpush1.msra.mxu0 0.0
    %144 = vmatprep.subr.mxu0 0.0
    %145 = vmatpush1.msra.mxu0 0.0
    %146 = vmatprep.subr.mxu0 0.0
    %147 = vmatpush1.msra.mxu0 0.0
    %148 = vmatprep.subr.mxu0 0.0
    %149 = vmatpush1.msra.mxu0 0.0
    %150 = vmatprep.mubr.f32.mxu0 0.0
    %151 = vmatmul.mubr.f32.gmra.mrb[0].mxu0 %v84
    %v152 = vpop.f32.mrb[0].mxu0
    %v153 = vadd.f32 %v80, %v152
    %v154 = vpop.f32.mrb[0].mxu0
    %155 = vdwg.mxu0
    %vm156 = vcmp.gt.f32.partialorder %v153, 0.0
    %v157 = vmul.f32 %v153, 1.442695
    %v158 = vpow.pop %v157
    %v159 = vsub.f32 %v158, 1.0
    %v160 = vsel %vm156, %v153, %v159
    %v161 = vld [vmem:[%s4] sm:$0xff]
    %v162 = vld [vmem:[%s4 + $0x8] sm:$0xff]
    %v163 = vld [vmem:[%s5] sm:$0x1]
    %v165 = vlaneseq
    %v166 = vshrl.u32 %v165, 7
    %v167 = vsub.s32 0, %v166
    %v168 = vrot.slane %v163, %v167
    %v171 = vsel %vm82, %v160, 0
    %173 = vmatprep.subr.mxu0 0.0
    %174 = vmatpush1.msra.mxu0 %v161
    %175 = vmatprep.subr.mxu0 0.0
    %176 = vmatpush1.msra.mxu0 %v162
    %177 = vmatprep.subr.mxu0 0.0
    %178 = vmatpush1.msra.mxu0 0.0
    %179 = vmatprep.subr.mxu0 0.0
    %180 = vmatpush1.msra.mxu0 0.0
    %181 = vmatprep.subr.mxu0 0.0
    %182 = vmatpush1.msra.mxu0 0.0
    %183 = vmatprep.subr.mxu0 0.0
    %184 = vmatpush1.msra.mxu0 0.0
    %185 = vmatprep.subr.mxu0 0.0
    %186 = vmatpush1.msra.mxu0 0.0
    %187 = vmatprep.subr.mxu0 0.0
    %188 = vmatpush1.msra.mxu0 0.0
    %189 = vmatprep.subr.mxu0 0.0
    %190 = vmatpush1.msra.mxu0 0.0
    %191 = vmatprep.subr.mxu0 0.0
    %192 = vmatpush1.msra.mxu0 0.0
    %193 = vmatprep.subr.mxu0 0.0
    %194 = vmatpush1.msra.mxu0 0.0
    %195 = vmatprep.subr.mxu0 0.0
    %196 = vmatpush1.msra.mxu0 0.0
    %197 = vmatprep.subr.mxu0 0.0
    %198 = vmatpush1.msra.mxu0 0.0
    %199 = vmatprep.subr.mxu0 0.0
    %200 = vmatpush1.msra.mxu0 0.0
    %201 = vmatprep.subr.mxu0 0.0
    %202 = vmatpush1.msra.mxu0 0.0
    %203 = vmatprep.subr.mxu0 0.0
    %204 = vmatpush1.msra.mxu0 0.0
    %205 = vmatprep.subr.mxu0 0.0
    %206 = vmatpush1.msra.mxu0 0.0
    %207 = vmatprep.subr.mxu0 0.0
    %208 = vmatpush1.msra.mxu0 0.0
    %209 = vmatprep.subr.mxu0 0.0
    %210 = vmatpush1.msra.mxu0 0.0
    %211 = vmatprep.subr.mxu0 0.0
    %212 = vmatpush1.msra.mxu0 0.0
    %213 = vmatprep.subr.mxu0 0.0
    %214 = vmatpush1.msra.mxu0 0.0
    %215 = vmatprep.subr.mxu0 0.0
    %216 = vmatpush1.msra.mxu0 0.0
    %217 = vmatprep.subr.mxu0 0.0
    %218 = vmatpush1.msra.mxu0 0.0
    %219 = vmatprep.subr.mxu0 0.0
    %220 = vmatpush1.msra.mxu0 0.0
    %221 = vmatprep.subr.mxu0 0.0
    %222 = vmatpush1.msra.mxu0 0.0
    %223 = vmatprep.subr.mxu0 0.0
    %224 = vmatpush1.msra.mxu0 0.0
    %225 = vmatprep.subr.mxu0 0.0
    %226 = vmatpush1.msra.mxu0 0.0
    %227 = vmatprep.subr.mxu0 0.0
    %228 = vmatpush1.msra.mxu0 0.0
    %229 = vmatprep.subr.mxu0 0.0
    %230 = vmatpush1.msra.mxu0 0.0
    %231 = vmatprep.subr.mxu0 0.0
    %232 = vmatpush1.msra.mxu0 0.0
    %233 = vmatprep.subr.mxu0 0.0
    %234 = vmatpush1.msra.mxu0 0.0
    %235 = vmatprep.subr.mxu0 0.0
    %236 = vmatpush1.msra.mxu0 0.0
    %237 = vmatprep.mubr.f32.mxu0 0.0
    %238 = vmatmul.mubr.f32.gmra.mrb[0].mxu0 %v171
    %v239 = vpop.f32.mrb[0].mxu0
    %v240 = vadd.f32 %v168, %v239
    %v241 = vpop.f32.mrb[0].mxu0
    %242 = vdwg.mxu0
    %vm243 = vcmp.gt.f32.partialorder %v240, 0.0
    %v244 = vmul.f32 %v240, 1.442695
    %v245 = vpow.pop %v244
    %v246 = vsub.f32 %v245, 1.0
    %v247 = vsel %vm243, %v240, %v246
    %v248 = vld [vmem:[%s6] sm:$0xff]
    %v249 = vld [vmem:[%s6 + $0x8] sm:$0xff]
    %v250 = vld [vmem:[%s7] sm:$0x1]
    %v252 = vlaneseq
    %v253 = vshrl.u32 %v252, 7
    %v254 = vsub.s32 0, %v253
    %v255 = vrot.slane %v250, %v254
    %v258 = vsel %vm82, %v247, 0
    %260 = vmatprep.subr.mxu0 0.0
    %261 = vmatpush1.msra.mxu0 %v248
    %262 = vmatprep.subr.mxu0 0.0
    %263 = vmatpush1.msra.mxu0 %v249
    %264 = vmatprep.subr.mxu0 0.0
    %265 = vmatpush1.msra.mxu0 0.0
    %266 = vmatprep.subr.mxu0 0.0
    %267 = vmatpush1.msra.mxu0 0.0
    %268 = vmatprep.subr.mxu0 0.0
    %269 = vmatpush1.msra.mxu0 0.0
    %270 = vmatprep.subr.mxu0 0.0
    %271 = vmatpush1.msra.mxu0 0.0
    %272 = vmatprep.subr.mxu0 0.0
    %273 = vmatpush1.msra.mxu0 0.0
    %274 = vmatprep.subr.mxu0 0.0
    %275 = vmatpush1.msra.mxu0 0.0
    %276 = vmatprep.subr.mxu0 0.0
    %277 = vmatpush1.msra.mxu0 0.0
    %278 = vmatprep.subr.mxu0 0.0
    %279 = vmatpush1.msra.mxu0 0.0
    %280 = vmatprep.subr.mxu0 0.0
    %281 = vmatpush1.msra.mxu0 0.0
    %282 = vmatprep.subr.mxu0 0.0
    %283 = vmatpush1.msra.mxu0 0.0
    %284 = vmatprep.subr.mxu0 0.0
    %285 = vmatpush1.msra.mxu0 0.0
    %286 = vmatprep.subr.mxu0 0.0
    %287 = vmatpush1.msra.mxu0 0.0
    %288 = vmatprep.subr.mxu0 0.0
    %289 = vmatpush1.msra.mxu0 0.0
    %290 = vmatprep.subr.mxu0 0.0
    %291 = vmatpush1.msra.mxu0 0.0
    %292 = vmatprep.subr.mxu0 0.0
    %293 = vmatpush1.msra.mxu0 0.0
    %294 = vmatprep.subr.mxu0 0.0
    %295 = vmatpush1.msra.mxu0 0.0
    %296 = vmatprep.subr.mxu0 0.0
    %297 = vmatpush1.msra.mxu0 0.0
    %298 = vmatprep.subr.mxu0 0.0
    %299 = vmatpush1.msra.mxu0 0.0
    %300 = vmatprep.subr.mxu0 0.0
    %301 = vmatpush1.msra.mxu0 0.0
    %302 = vmatprep.subr.mxu0 0.0
    %303 = vmatpush1.msra.mxu0 0.0
    %304 = vmatprep.subr.mxu0 0.0
    %305 = vmatpush1.msra.mxu0 0.0
    %306 = vmatprep.subr.mxu0 0.0
    %307 = vmatpush1.msra.mxu0 0.0
    %308 = vmatprep.subr.mxu0 0.0
    %309 = vmatpush1.msra.mxu0 0.0
    %310 = vmatprep.subr.mxu0 0.0
    %311 = vmatpush1.msra.mxu0 0.0
    %312 = vmatprep.subr.mxu0 0.0
    %313 = vmatpush1.msra.mxu0 0.0
    %314 = vmatprep.subr.mxu0 0.0
    %315 = vmatpush1.msra.mxu0 0.0
    %316 = vmatprep.subr.mxu0 0.0
    %317 = vmatpush1.msra.mxu0 0.0
    %318 = vmatprep.subr.mxu0 0.0
    %319 = vmatpush1.msra.mxu0 0.0
    %320 = vmatprep.subr.mxu0 0.0
    %321 = vmatpush1.msra.mxu0 0.0
    %322 = vmatprep.subr.mxu0 0.0
    %323 = vmatpush1.msra.mxu0 0.0
    %324 = vmatprep.mubr.f32.mxu0 0.0
    %325 = vmatmul.mubr.f32.gmra.mrb[0].mxu0 %v258
    %v326 = vpop.f32.mrb[0].mxu0
    %v327 = vadd.f32 %v255, %v326
    %v328 = vpop.f32.mrb[0].mxu0
    %329 = vdwg.mxu0
    %v330 = vtanh.pop %v327
    %v331 = vld [vmem:[%s8] sm:$0xff]
    %v332 = vld [vmem:[%s8 + $0x8] sm:$0xff]
    %v333 = vld [vmem:[%s8 + $0x10] sm:$0xff]
    %v334 = vld [vmem:[%s8 + $0x18] sm:$0xff]
    %v335 = vld [vmem:[%s8 + $0x20] sm:$0xff]
    %v336 = vld [vmem:[%s8 + $0x28] sm:$0xff]
    %v337 = vld [vmem:[%s8 + $0x30] sm:$0xff]
    %v338 = vld [vmem:[%s8 + $0x38] sm:$0xff]
    %v339 = vld [vmem:[%s8 + $0x40] sm:$0xff]
    %v340 = vld [vmem:[%s8 + $0x48] sm:$0xff]
    %v341 = vld [vmem:[%s8 + $0x50] sm:$0xff]
    %v342 = vld [vmem:[%s8 + $0x58] sm:$0xff]
    %v343 = vld [vmem:[%s8 + $0x60] sm:$0xff]
    %v344 = vld [vmem:[%s8 + $0x68] sm:$0xff]
    %v345 = vld [vmem:[%s8 + $0x70] sm:$0xff]
    %v346 = vld [vmem:[%s9] sm:$0x1]
    %v348 = vlaneseq
    %v349 = vshrl.u32 %v348, 7
    %v350 = vsub.s32 0, %v349
    %v351 = vrot.slane %v346, %v350
    %vm353 = vcmask 982016
    %v355 = vsel %vm353, %v330, 0
    %357 = vmatprep.subr.mxu0 0.0
    %358 = vmatpush1.msra.mxu0 %v331
    %359 = vmatprep.subr.mxu0 0.0
    %360 = vmatpush1.msra.mxu0 %v332
    %361 = vmatprep.subr.mxu0 0.0
    %362 = vmatpush1.msra.mxu0 %v333
    %363 = vmatprep.subr.mxu0 0.0
    %364 = vmatpush1.msra.mxu0 %v334
    %365 = vmatprep.subr.mxu0 0.0
    %366 = vmatpush1.msra.mxu0 %v335
    %367 = vmatprep.subr.mxu0 0.0
    %368 = vmatpush1.msra.mxu0 %v336
    %369 = vmatprep.subr.mxu0 0.0
    %370 = vmatpush1.msra.mxu0 %v337
    %371 = vmatprep.subr.mxu0 0.0
    %372 = vmatpush1.msra.mxu0 %v338
    %373 = vmatprep.subr.mxu0 0.0
    %374 = vmatpush1.msra.mxu0 %v339
    %375 = vmatprep.subr.mxu0 0.0
    %376 = vmatpush1.msra.mxu0 %v340
    %377 = vmatprep.subr.mxu0 0.0
    %378 = vmatpush1.msra.mxu0 %v341
    %379 = vmatprep.subr.mxu0 0.0
    %380 = vmatpush1.msra.mxu0 %v342
    %381 = vmatprep.subr.mxu0 0.0
    %382 = vmatpush1.msra.mxu0 %v343
    %383 = vmatprep.subr.mxu0 0.0
    %384 = vmatpush1.msra.mxu0 %v344
    %385 = vmatprep.subr.mxu0 0.0
    %386 = vmatpush1.msra.mxu0 %v345
    %387 = vmatprep.subr.mxu0 0.0
    %388 = vmatpush1.msra.mxu0 0.0
    %389 = vmatprep.subr.mxu0 0.0
    %390 = vmatpush1.msra.mxu0 0.0
    %391 = vmatprep.subr.mxu0 0.0
    %392 = vmatpush1.msra.mxu0 0.0
    %393 = vmatprep.subr.mxu0 0.0
    %394 = vmatpush1.msra.mxu0 0.0
    %395 = vmatprep.subr.mxu0 0.0
    %396 = vmatpush1.msra.mxu0 0.0
    %397 = vmatprep.subr.mxu0 0.0
    %398 = vmatpush1.msra.mxu0 0.0
    %399 = vmatprep.subr.mxu0 0.0
    %400 = vmatpush1.msra.mxu0 0.0
    %401 = vmatprep.subr.mxu0 0.0
    %402 = vmatpush1.msra.mxu0 0.0
    %403 = vmatprep.subr.mxu0 0.0
    %404 = vmatpush1.msra.mxu0 0.0
    %405 = vmatprep.subr.mxu0 0.0
    %406 = vmatpush1.msra.mxu0 0.0
    %407 = vmatprep.subr.mxu0 0.0
    %408 = vmatpush1.msra.mxu0 0.0
    %409 = vmatprep.subr.mxu0 0.0
    %410 = vmatpush1.msra.mxu0 0.0
    %411 = vmatprep.subr.mxu0 0.0
    %412 = vmatpush1.msra.mxu0 0.0
    %413 = vmatprep.subr.mxu0 0.0
    %414 = vmatpush1.msra.mxu0 0.0
    %415 = vmatprep.subr.mxu0 0.0
    %416 = vmatpush1.msra.mxu0 0.0
    %417 = vmatprep.subr.mxu0 0.0
    %418 = vmatpush1.msra.mxu0 0.0
    %419 = vmatprep.subr.mxu0 0.0
    %420 = vmatpush1.msra.mxu0 0.0
    %421 = vmatprep.mubr.f32.mxu0 0.0
    %422 = vmatmul.mubr.f32.gmra.mrb[0].mxu0 %v355
    %v423 = vpop.f32.mrb[0].mxu0
    %v424 = vadd.f32 %v351, %v423
    %v425 = vpop.f32.mrb[0].mxu0
    %426 = vdwg.mxu0
    %v427 = vtanh.pop %v424
    %v428 = vld [vmem:[%s10] sm:$0xff]
    %v429 = vld [vmem:[%s10 + $0x8] sm:$0xff]
    %v430 = vld [vmem:[%s10 + $0x10] sm:$0xff]
    %v431 = vld [vmem:[%s10 + $0x18] sm:$0xff]
    %v432 = vld [vmem:[%s10 + $0x20] sm:$0xff]
    %v433 = vld [vmem:[%s10 + $0x28] sm:$0xff]
    %v434 = vld [vmem:[%s11] sm:$0x1]
    %v436 = vlaneseq
    %v437 = vshrl.u32 %v436, 7
    %v438 = vsub.s32 0, %v437
    %v439 = vrot.slane %v434, %v438
    %vm441 = vcmask 392192
    %v443 = vsel %vm441, %v427, 0
    %445 = vmatprep.subr.mxu0 0.0
    %446 = vmatpush1.msra.mxu0 %v428
    %447 = vmatprep.subr.mxu0 0.0
    %448 = vmatpush1.msra.mxu0 %v429
    %449 = vmatprep.subr.mxu0 0.0
    %450 = vmatpush1.msra.mxu0 %v430
    %451 = vmatprep.subr.mxu0 0.0
    %452 = vmatpush1.msra.mxu0 %v431
    %453 = vmatprep.subr.mxu0 0.0
    %454 = vmatpush1.msra.mxu0 %v432
    %455 = vmatprep.subr.mxu0 0.0
    %456 = vmatpush1.msra.mxu0 %v433
    %457 = vmatprep.subr.mxu0 0.0
    %458 = vmatpush1.msra.mxu0 0.0
    %459 = vmatprep.subr.mxu0 0.0
    %460 = vmatpush1.msra.mxu0 0.0
    %461 = vmatprep.subr.mxu0 0.0
    %462 = vmatpush1.msra.mxu0 0.0
    %463 = vmatprep.subr.mxu0 0.0
    %464 = vmatpush1.msra.mxu0 0.0
    %465 = vmatprep.subr.mxu0 0.0
    %466 = vmatpush1.msra.mxu0 0.0
    %467 = vmatprep.subr.mxu0 0.0
    %468 = vmatpush1.msra.mxu0 0.0
    %469 = vmatprep.subr.mxu0 0.0
    %470 = vmatpush1.msra.mxu0 0.0
    %471 = vmatprep.subr.mxu0 0.0
    %472 = vmatpush1.msra.mxu0 0.0
    %473 = vmatprep.subr.mxu0 0.0
    %474 = vmatpush1.msra.mxu0 0.0
    %475 = vmatprep.subr.mxu0 0.0
    %476 = vmatpush1.msra.mxu0 0.0
    %477 = vmatprep.subr.mxu0 0.0
    %478 = vmatpush1.msra.mxu0 0.0
    %479 = vmatprep.subr.mxu0 0.0
    %480 = vmatpush1.msra.mxu0 0.0
    %481 = vmatprep.subr.mxu0 0.0
    %482 = vmatpush1.msra.mxu0 0.0
    %483 = vmatprep.subr.mxu0 0.0
    %484 = vmatpush1.msra.mxu0 0.0
    %485 = vmatprep.subr.mxu0 0.0
    %486 = vmatpush1.msra.mxu0 0.0
    %487 = vmatprep.subr.mxu0 0.0
    %488 = vmatpush1.msra.mxu0 0.0
    %489 = vmatprep.subr.mxu0 0.0
    %490 = vmatpush1.msra.mxu0 0.0
    %491 = vmatprep.subr.mxu0 0.0
    %492 = vmatpush1.msra.mxu0 0.0
    %493 = vmatprep.subr.mxu0 0.0
    %494 = vmatpush1.msra.mxu0 0.0
    %495 = vmatprep.subr.mxu0 0.0
    %496 = vmatpush1.msra.mxu0 0.0
    %497 = vmatprep.subr.mxu0 0.0
    %498 = vmatpush1.msra.mxu0 0.0
    %499 = vmatprep.subr.mxu0 0.0
    %500 = vmatpush1.msra.mxu0 0.0
    %501 = vmatprep.subr.mxu0 0.0
    %502 = vmatpush1.msra.mxu0 0.0
    %503 = vmatprep.subr.mxu0 0.0
    %504 = vmatpush1.msra.mxu0 0.0
    %505 = vmatprep.subr.mxu0 0.0
    %506 = vmatpush1.msra.mxu0 0.0
    %507 = vmatprep.subr.mxu0 0.0
    %508 = vmatpush1.msra.mxu0 0.0
    %509 = vmatprep.mubr.f32.mxu0 0.0
    %510 = vmatmul.mubr.f32.gmra.mrb[0].mxu0 %v443
    %v511 = vpop.f32.mrb[0].mxu0
    %v512 = vadd.f32 %v439, %v511
    %v513 = vpop.f32.mrb[0].mxu0
    %514 = vdwg.mxu0
    %v515 = vtanh.pop %v512
    %v516 = vld [vmem:[%s12] sm:$0xff]
    %v517 = vld [vmem:[%s12 + $0x8] sm:$0xff]
    %v518 = vld [vmem:[%s12 + $0x10] sm:$0xff]
    %v519 = vld [vmem:[%s12 + $0x18] sm:$0xff]
    %v520 = vld [vmem:[%s12 + $0x20] sm:$0xff]
    %v521 = vld [vmem:[%s13] sm:$0x1]
    %v523 = vlaneseq
    %v524 = vshrl.u32 %v523, 7
    %v525 = vsub.s32 0, %v524
    %v526 = vrot.slane %v521, %v525
    %vm528 = vcmask 326656
    %v530 = vsel %vm528, %v515, 0
    %532 = vmatprep.subr.mxu0 0.0
    %533 = vmatpush1.msra.mxu0 %v516
    %534 = vmatprep.subr.mxu0 0.0
    %535 = vmatpush1.msra.mxu0 %v517
    %536 = vmatprep.subr.mxu0 0.0
    %537 = vmatpush1.msra.mxu0 %v518
    %538 = vmatprep.subr.mxu0 0.0
    %539 = vmatpush1.msra.mxu0 %v519
    %540 = vmatprep.subr.mxu0 0.0
    %541 = vmatpush1.msra.mxu0 %v520
    %542 = vmatprep.subr.mxu0 0.0
    %543 = vmatpush1.msra.mxu0 0.0
    %544 = vmatprep.subr.mxu0 0.0
    %545 = vmatpush1.msra.mxu0 0.0
    %546 = vmatprep.subr.mxu0 0.0
    %547 = vmatpush1.msra.mxu0 0.0
    %548 = vmatprep.subr.mxu0 0.0
    %549 = vmatpush1.msra.mxu0 0.0
    %550 = vmatprep.subr.mxu0 0.0
    %551 = vmatpush1.msra.mxu0 0.0
    %552 = vmatprep.subr.mxu0 0.0
    %553 = vmatpush1.msra.mxu0 0.0
    %554 = vmatprep.subr.mxu0 0.0
    %555 = vmatpush1.msra.mxu0 0.0
    %556 = vmatprep.subr.mxu0 0.0
    %557 = vmatpush1.msra.mxu0 0.0
    %558 = vmatprep.subr.mxu0 0.0
    %559 = vmatpush1.msra.mxu0 0.0
    %560 = vmatprep.subr.mxu0 0.0
    %561 = vmatpush1.msra.mxu0 0.0
    %562 = vmatprep.subr.mxu0 0.0
    %563 = vmatpush1.msra.mxu0 0.0
    %564 = vmatprep.subr.mxu0 0.0
    %565 = vmatpush1.msra.mxu0 0.0
    %566 = vmatprep.subr.mxu0 0.0
    %567 = vmatpush1.msra.mxu0 0.0
    %568 = vmatprep.subr.mxu0 0.0
    %569 = vmatpush1.msra.mxu0 0.0
    %570 = vmatprep.subr.mxu0 0.0
    %571 = vmatpush1.msra.mxu0 0.0
    %572 = vmatprep.subr.mxu0 0.0
    %573 = vmatpush1.msra.mxu0 0.0
    %574 = vmatprep.subr.mxu0 0.0
    %575 = vmatpush1.msra.mxu0 0.0
    %576 = vmatprep.subr.mxu0 0.0
    %577 = vmatpush1.msra.mxu0 0.0
    %578 = vmatprep.subr.mxu0 0.0
    %579 = vmatpush1.msra.mxu0 0.0
    %580 = vmatprep.subr.mxu0 0.0
    %581 = vmatpush1.msra.mxu0 0.0
    %582 = vmatprep.subr.mxu0 0.0
    %583 = vmatpush1.msra.mxu0 0.0
    %584 = vmatprep.subr.mxu0 0.0
    %585 = vmatpush1.msra.mxu0 0.0
    %586 = vmatprep.subr.mxu0 0.0
    %587 = vmatpush1.msra.mxu0 0.0
    %588 = vmatprep.subr.mxu0 0.0
    %589 = vmatpush1.msra.mxu0 0.0
    %590 = vmatprep.subr.mxu0 0.0
    %591 = vmatpush1.msra.mxu0 0.0
    %592 = vmatprep.subr.mxu0 0.0
    %593 = vmatpush1.msra.mxu0 0.0
    %594 = vmatprep.subr.mxu0 0.0
    %595 = vmatpush1.msra.mxu0 0.0
    %596 = vmatprep.mubr.f32.mxu0 0.0
    %597 = vmatmul.mubr.f32.gmra.mrb[0].mxu0 %v530
    %v598 = vpop.f32.mrb[0].mxu0
    %v599 = vadd.f32 %v526, %v598
    %v600 = vpop.f32.mrb[0].mxu0
    %601 = vdwg.mxu0
    %v602 = vtanh.pop %v599
    %v603 = vld [vmem:[%s14] sm:$0xff]
    %v604 = vld [vmem:[%s14 + $0x8] sm:$0xff]
    %v605 = vld [vmem:[%s14 + $0x10] sm:$0xff]
    %v606 = vld [vmem:[%s14 + $0x18] sm:$0xff]
    %v607 = vld [vmem:[%s15] sm:$0x1]
    %v609 = vlaneseq
    %v610 = vshrl.u32 %v609, 7
    %v611 = vsub.s32 0, %v610
    %v612 = vrot.slane %v607, %v611
    %vm614 = vcmask 261120
    %v616 = vsel %vm614, %v602, 0
    %618 = vmatprep.subr.mxu0 0.0
    %619 = vmatpush1.msra.mxu0 %v603
    %620 = vmatprep.subr.mxu0 0.0
    %621 = vmatpush1.msra.mxu0 %v604
    %622 = vmatprep.subr.mxu0 0.0
    %623 = vmatpush1.msra.mxu0 %v605
    %624 = vmatprep.subr.mxu0 0.0
    %625 = vmatpush1.msra.mxu0 %v606
    %626 = vmatprep.subr.mxu0 0.0
    %627 = vmatpush1.msra.mxu0 0.0
    %628 = vmatprep.subr.mxu0 0.0
    %629 = vmatpush1.msra.mxu0 0.0
    %630 = vmatprep.subr.mxu0 0.0
    %631 = vmatpush1.msra.mxu0 0.0
    %632 = vmatprep.subr.mxu0 0.0
    %633 = vmatpush1.msra.mxu0 0.0
    %634 = vmatprep.subr.mxu0 0.0
    %635 = vmatpush1.msra.mxu0 0.0
    %636 = vmatprep.subr.mxu0 0.0
    %637 = vmatpush1.msra.mxu0 0.0
    %638 = vmatprep.subr.mxu0 0.0
    %639 = vmatpush1.msra.mxu0 0.0
    %640 = vmatprep.subr.mxu0 0.0
    %641 = vmatpush1.msra.mxu0 0.0
    %642 = vmatprep.subr.mxu0 0.0
    %643 = vmatpush1.msra.mxu0 0.0
    %644 = vmatprep.subr.mxu0 0.0
    %645 = vmatpush1.msra.mxu0 0.0
    %646 = vmatprep.subr.mxu0 0.0
    %647 = vmatpush1.msra.mxu0 0.0
    %648 = vmatprep.subr.mxu0 0.0
    %649 = vmatpush1.msra.mxu0 0.0
    %650 = vmatprep.subr.mxu0 0.0
    %651 = vmatpush1.msra.mxu0 0.0
    %652 = vmatprep.subr.mxu0 0.0
    %653 = vmatpush1.msra.mxu0 0.0
    %654 = vmatprep.subr.mxu0 0.0
    %655 = vmatpush1.msra.mxu0 0.0
    %656 = vmatprep.subr.mxu0 0.0
    %657 = vmatpush1.msra.mxu0 0.0
    %658 = vmatprep.subr.mxu0 0.0
    %659 = vmatpush1.msra.mxu0 0.0
    %660 = vmatprep.subr.mxu0 0.0
    %661 = vmatpush1.msra.mxu0 0.0
    %662 = vmatprep.subr.mxu0 0.0
    %663 = vmatpush1.msra.mxu0 0.0
    %664 = vmatprep.subr.mxu0 0.0
    %665 = vmatpush1.msra.mxu0 0.0
    %666 = vmatprep.subr.mxu0 0.0
    %667 = vmatpush1.msra.mxu0 0.0
    %668 = vmatprep.subr.mxu0 0.0
    %669 = vmatpush1.msra.mxu0 0.0
    %670 = vmatprep.subr.mxu0 0.0
    %671 = vmatpush1.msra.mxu0 0.0
    %672 = vmatprep.subr.mxu0 0.0
    %673 = vmatpush1.msra.mxu0 0.0
    %674 = vmatprep.subr.mxu0 0.0
    %675 = vmatpush1.msra.mxu0 0.0
    %676 = vmatprep.subr.mxu0 0.0
    %677 = vmatpush1.msra.mxu0 0.0
    %678 = vmatprep.subr.mxu0 0.0
    %679 = vmatpush1.msra.mxu0 0.0
    %680 = vmatprep.subr.mxu0 0.0
    %681 = vmatpush1.msra.mxu0 0.0
    %682 = vmatprep.mubr.f32.mxu0 0.0
    %683 = vmatmul.mubr.f32.gmra.mrb[0].mxu0 %v616
    %v684 = vpop.f32.mrb[0].mxu0
    %v685 = vadd.f32 %v612, %v684
    %v686 = vpop.f32.mrb[0].mxu0
    %687 = vdwg.mxu0
    %v688 = vtanh.pop %v685
    %v689 = vld [vmem:[%s16] sm:$0xff]
    %v690 = vld [vmem:[%s16 + $0x8] sm:$0xff]
    %v691 = vld [vmem:[%s16 + $0x10] sm:$0xff]
    %v692 = vld [vmem:[%s16 + $0x18] sm:$0xff]
    %v693 = vld [vmem:[%s17] sm:$0x1]
    %v695 = vlaneseq
    %v696 = vshrl.u32 %v695, 7
    %v697 = vsub.s32 0, %v696
    %v698 = vrot.slane %v693, %v697
    %v701 = vsel %vm614, %v688, 0
    %703 = vmatprep.subr.mxu0 0.0
    %704 = vmatpush1.msra.mxu0 %v689
    %705 = vmatprep.subr.mxu0 0.0
    %706 = vmatpush1.msra.mxu0 %v690
    %707 = vmatprep.subr.mxu0 0.0
    %708 = vmatpush1.msra.mxu0 %v691
    %709 = vmatprep.subr.mxu0 0.0
    %710 = vmatpush1.msra.mxu0 %v692
    %711 = vmatprep.subr.mxu0 0.0
    %712 = vmatpush1.msra.mxu0 0.0
    %713 = vmatprep.subr.mxu0 0.0
    %714 = vmatpush1.msra.mxu0 0.0
    %715 = vmatprep.subr.mxu0 0.0
    %716 = vmatpush1.msra.mxu0 0.0
    %717 = vmatprep.subr.mxu0 0.0
    %718 = vmatpush1.msra.mxu0 0.0
    %719 = vmatprep.subr.mxu0 0.0
    %720 = vmatpush1.msra.mxu0 0.0
    %721 = vmatprep.subr.mxu0 0.0
    %722 = vmatpush1.msra.mxu0 0.0
    %723 = vmatprep.subr.mxu0 0.0
    %724 = vmatpush1.msra.mxu0 0.0
    %725 = vmatprep.subr.mxu0 0.0
    %726 = vmatpush1.msra.mxu0 0.0
    %727 = vmatprep.subr.mxu0 0.0
    %728 = vmatpush1.msra.mxu0 0.0
    %729 = vmatprep.subr.mxu0 0.0
    %730 = vmatpush1.msra.mxu0 0.0
    %731 = vmatprep.subr.mxu0 0.0
    %732 = vmatpush1.msra.mxu0 0.0
    %733 = vmatprep.subr.mxu0 0.0
    %734 = vmatpush1.msra.mxu0 0.0
    %735 = vmatprep.subr.mxu0 0.0
    %736 = vmatpush1.msra.mxu0 0.0
    %737 = vmatprep.subr.mxu0 0.0
    %738 = vmatpush1.msra.mxu0 0.0
    %739 = vmatprep.subr.mxu0 0.0
    %740 = vmatpush1.msra.mxu0 0.0
    %741 = vmatprep.subr.mxu0 0.0
    %742 = vmatpush1.msra.mxu0 0.0
    %743 = vmatprep.subr.mxu0 0.0
    %744 = vmatpush1.msra.mxu0 0.0
    %745 = vmatprep.subr.mxu0 0.0
    %746 = vmatpush1.msra.mxu0 0.0
    %747 = vmatprep.subr.mxu0 0.0
    %748 = vmatpush1.msra.mxu0 0.0
    %749 = vmatprep.subr.mxu0 0.0
    %750 = vmatpush1.msra.mxu0 0.0
    %751 = vmatprep.subr.mxu0 0.0
    %752 = vmatpush1.msra.mxu0 0.0
    %753 = vmatprep.subr.mxu0 0.0
    %754 = vmatpush1.msra.mxu0 0.0
    %755 = vmatprep.subr.mxu0 0.0
    %756 = vmatpush1.msra.mxu0 0.0
    %757 = vmatprep.subr.mxu0 0.0
    %758 = vmatpush1.msra.mxu0 0.0
    %759 = vmatprep.subr.mxu0 0.0
    %760 = vmatpush1.msra.mxu0 0.0
    %761 = vmatprep.subr.mxu0 0.0
    %762 = vmatpush1.msra.mxu0 0.0
    %763 = vmatprep.subr.mxu0 0.0
    %764 = vmatpush1.msra.mxu0 0.0
    %765 = vmatprep.subr.mxu0 0.0
    %766 = vmatpush1.msra.mxu0 0.0
    %767 = vmatprep.mubr.f32.mxu0 0.0
    %768 = vmatmul.mubr.f32.gmra.mrb[0].mxu0 %v701
    %v769 = vpop.f32.mrb[0].mxu0
    %v770 = vadd.f32 %v698, %v769
    %v771 = vpop.f32.mrb[0].mxu0
    %772 = vdwg.mxu0
    %v773 = vsel %vm82, %v770, 0.0
    %v774 = vrot.slane %v773, 4
    %v775 = vadd.f32 %v773, %v774
    %v776 = vrot.slane %v775, 2
    %v777 = vadd.f32 %v775, %v776
    %v778 = vrot.slane %v777, 1
    %v779 = vadd.f32 %v777, %v778
    %v780 = vrcp.pop 8.0
    %v781 = vmul.f32 %v779, %v780
    %v782 = vsub.f32 %v770, %v781
    %v783 = vmul.f32 %v782, %v782
    %v784 = vsel %vm82, %v783, 0.0
    %v785 = vrot.slane %v784, 4
    %v786 = vadd.f32 %v784, %v785
    %v787 = vrot.slane %v786, 2
    %v788 = vadd.f32 %v786, %v787
    %v789 = vrot.slane %v788, 1
    %v790 = vadd.f32 %v788, %v789
    %v791 = vmul.f32 %v790, %v780
    %v792 = vadd.f32 %v791, 1e-05
    %v793 = vrsqrt.pop %v792
    %v794 = vmul.f32 %v782, %v793
    %v795 = vld [vmem:[%s1] sm:$0xff]
    %v796 = vadd.f32 %v794, %v795
    %v797 = vld [vmem:[%s18] sm:$0xff]
    %v798 = vld [vmem:[%s18 + $0x8] sm:$0xff]
    %v799 = vld [vmem:[%s19] sm:$0x1]
    %v801 = vlaneseq
    %v802 = vshrl.u32 %v801, 7
    %v803 = vsub.s32 0, %v802
    %v804 = vrot.slane %v799, %v803
    %v807 = vsel %vm82, %v796, 0
    %809 = vmatprep.subr.mxu0 0.0
    %810 = vmatpush1.msra.mxu0 %v797
    %811 = vmatprep.subr.mxu0 0.0
    %812 = vmatpush1.msra.mxu0 %v798
    %813 = vmatprep.subr.mxu0 0.0
    %814 = vmatpush1.msra.mxu0 0.0
    %815 = vmatprep.subr.mxu0 0.0
    %816 = vmatpush1.msra.mxu0 0.0
    %817 = vmatprep.subr.mxu0 0.0
    %818 = vmatpush1.msra.mxu0 0.0
    %819 = vmatprep.subr.mxu0 0.0
    %820 = vmatpush1.msra.mxu0 0.0
    %821 = vmatprep.subr.mxu0 0.0
    %822 = vmatpush1.msra.mxu0 0.0
    %823 = vmatprep.subr.mxu0 0.0
    %824 = vmatpush1.msra.mxu0 0.0
    %825 = vmatprep.subr.mxu0 0.0
    %826 = vmatpush1.msra.mxu0 0.0
    %827 = vmatprep.subr.mxu0 0.0
    %828 = vmatpush1.msra.mxu0 0.0
    %829 = vmatprep.subr.mxu0 0.0
    %830 = vmatpush1.msra.mxu0 0.0
    %831 = vmatprep.subr.mxu0 0.0
    %832 = vmatpush1.msra.mxu0 0.0
    %833 = vmatprep.subr.mxu0 0.0
    %834 = vmatpush1.msra.mxu0 0.0
    %835 = vmatprep.subr.mxu0 0.0
    %836 = vmatpush1.msra.mxu0 0.0
    %837 = vmatprep.subr.mxu0 0.0
    %838 = vmatpush1.msra.mxu0 0.0
    %839 = vmatprep.subr.mxu0 0.0
    %840 = vmatpush1.msra.mxu0 0.0
    %841 = vmatprep.subr.mxu0 0.0
    %842 = vmatpush1.msra.mxu0 0.0
    %843 = vmatprep.subr.mxu0 0.0
    %844 = vmatpush1.msra.mxu0 0.0
    %845 = vmatprep.subr.mxu0 0.0
    %846 = vmatpush1.msra.mxu0 0.0
    %847 = vmatprep.subr.mxu0 0.0
    %848 = vmatpush1.msra.mxu0 0.0
    %849 = vmatprep.subr.mxu0 0.0
    %850 = vmatpush1.msra.mxu0 0.0
    %851 = vmatprep.subr.mxu0 0.0
    %852 = vmatpush1.msra.mxu0 0.0
    %853 = vmatprep.subr.mxu0 0.0
    %854 = vmatpush1.msra.mxu0 0.0
    %855 = vmatprep.subr.mxu0 0.0
    %856 = vmatpush1.msra.mxu0 0.0
    %857 = vmatprep.subr.mxu0 0.0
    %858 = vmatpush1.msra.mxu0 0.0
    %859 = vmatprep.subr.mxu0 0.0
    %860 = vmatpush1.msra.mxu0 0.0
    %861 = vmatprep.subr.mxu0 0.0
    %862 = vmatpush1.msra.mxu0 0.0
    %863 = vmatprep.subr.mxu0 0.0
    %864 = vmatpush1.msra.mxu0 0.0
    %865 = vmatprep.subr.mxu0 0.0
    %866 = vmatpush1.msra.mxu0 0.0
    %867 = vmatprep.subr.mxu0 0.0
    %868 = vmatpush1.msra.mxu0 0.0
    %869 = vmatprep.subr.mxu0 0.0
    %870 = vmatpush1.msra.mxu0 0.0
    %871 = vmatprep.subr.mxu0 0.0
    %872 = vmatpush1.msra.mxu0 0.0
    %873 = vmatprep.mubr.f32.mxu0 0.0
    %874 = vmatmul.mubr.f32.gmra.mrb[0].mxu0 %v807
    %v875 = vpop.f32.mrb[0].mxu0
    %v876 = vadd.f32 %v804, %v875
    %v877 = vpop.f32.mrb[0].mxu0
    %878 = vdwg.mxu0
    %v879 = vtanh.pop %v876
    %v880 = vld [vmem:[%s20] sm:$0xff]
    %v881 = vld [vmem:[%s20 + $0x8] sm:$0xff]
    %v882 = vld [vmem:[%s20 + $0x10] sm:$0xff]
    %v883 = vld [vmem:[%s20 + $0x18] sm:$0xff]
    %v884 = vld [vmem:[%s21] sm:$0x1]
    %v886 = vlaneseq
    %v887 = vshrl.u32 %v886, 7
    %v888 = vsub.s32 0, %v887
    %v889 = vrot.slane %v884, %v888
    %v892 = vsel %vm614, %v879, 0
    %894 = vmatprep.subr.mxu0 0.0
    %895 = vmatpush1.msra.mxu0 %v880
    %896 = vmatprep.subr.mxu0 0.0
    %897 = vmatpush1.msra.mxu0 %v881
    %898 = vmatprep.subr.mxu0 0.0
    %899 = vmatpush1.msra.mxu0 %v882
    %900 = vmatprep.subr.mxu0 0.0
    %901 = vmatpush1.msra.mxu0 %v883
    %902 = vmatprep.subr.mxu0 0.0
    %903 = vmatpush1.msra.mxu0 0.0
    %904 = vmatprep.subr.mxu0 0.0
    %905 = vmatpush1.msra.mxu0 0.0
    %906 = vmatprep.subr.mxu0 0.0
    %907 = vmatpush1.msra.mxu0 0.0
    %908 = vmatprep.subr.mxu0 0.0
    %909 = vmatpush1.msra.mxu0 0.0
    %910 = vmatprep.subr.mxu0 0.0
    %911 = vmatpush1.msra.mxu0 0.0
    %912 = vmatprep.subr.mxu0 0.0
    %913 = vmatpush1.msra.mxu0 0.0
    %914 = vmatprep.subr.mxu0 0.0
    %915 = vmatpush1.msra.mxu0 0.0
    %916 = vmatprep.subr.mxu0 0.0
    %917 = vmatpush1.msra.mxu0 0.0
    %918 = vmatprep.subr.mxu0 0.0
    %919 = vmatpush1.msra.mxu0 0.0
    %920 = vmatprep.subr.mxu0 0.0
    %921 = vmatpush1.msra.mxu0 0.0
    %922 = vmatprep.subr.mxu0 0.0
    %923 = vmatpush1.msra.mxu0 0.0
    %924 = vmatprep.subr.mxu0 0.0
    %925 = vmatpush1.msra.mxu0 0.0
    %926 = vmatprep.subr.mxu0 0.0
    %927 = vmatpush1.msra.mxu0 0.0
    %928 = vmatprep.subr.mxu0 0.0
    %929 = vmatpush1.msra.mxu0 0.0
    %930 = vmatprep.subr.mxu0 0.0
    %931 = vmatpush1.msra.mxu0 0.0
    %932 = vmatprep.subr.mxu0 0.0
    %933 = vmatpush1.msra.mxu0 0.0
    %934 = vmatprep.subr.mxu0 0.0
    %935 = vmatpush1.msra.mxu0 0.0
    %936 = vmatprep.subr.mxu0 0.0
    %937 = vmatpush1.msra.mxu0 0.0
    %938 = vmatprep.subr.mxu0 0.0
    %939 = vmatpush1.msra.mxu0 0.0
    %940 = vmatprep.subr.mxu0 0.0
    %941 = vmatpush1.msra.mxu0 0.0
    %942 = vmatprep.subr.mxu0 0.0
    %943 = vmatpush1.msra.mxu0 0.0
    %944 = vmatprep.subr.mxu0 0.0
    %945 = vmatpush1.msra.mxu0 0.0
    %946 = vmatprep.subr.mxu0 0.0
    %947 = vmatpush1.msra.mxu0 0.0
    %948 = vmatprep.subr.mxu0 0.0
    %949 = vmatpush1.msra.mxu0 0.0
    %950 = vmatprep.subr.mxu0 0.0
    %951 = vmatpush1.msra.mxu0 0.0
    %952 = vmatprep.subr.mxu0 0.0
    %953 = vmatpush1.msra.mxu0 0.0
    %954 = vmatprep.subr.mxu0 0.0
    %955 = vmatpush1.msra.mxu0 0.0
    %956 = vmatprep.subr.mxu0 0.0
    %957 = vmatpush1.msra.mxu0 0.0
    %958 = vmatprep.mubr.f32.mxu0 0.0
    %959 = vmatmul.mubr.f32.gmra.mrb[0].mxu0 %v892
    %v960 = vpop.f32.mrb[0].mxu0
    %v961 = vadd.f32 %v889, %v960
    %v962 = vpop.f32.mrb[0].mxu0
    %963 = vdwg.mxu0
    %964 = vst.msk [vmem:[#allocation2] sm:$0xff] %vm82, %v961
    // Predicated region
    $region90: #{tpu_custom_call.1} parent=1 // pred_check
      _
    $region91: #{tpu_custom_call.1} parent=1 // pred_check_branch
      %966 = sbr.rel (0) target = $region93
    $region92: #{tpu_custom_call.1} parent=1 // pred_region
      %s968 = ssub.s32 128, 128
      %969 = vsyncadd [#allocation3], %s968
      %s971 = sshll.u32 [#allocation2], 4
      %s972 = int_to_ptr.vmem [resolvable:$true] %s971
      %974 = dma.vmem_to_hbm [thread:$0]  %s972, 128, %s22, [#allocation3]
    $region93: #{tpu_custom_call.1} parent=1 // pred_fallthru
      _
    // Predicated region
    $region94: #{tpu_custom_call.1} parent=1 // pred_check
      _
    $region95: #{tpu_custom_call.1} parent=1 // pred_check_branch
      %976 = sbr.rel (0) target = $region97
    $region96: #{tpu_custom_call.1} parent=1 // pred_region
      %977 = dma.done [#allocation3], 128
    $region97: #{tpu_custom_call.1} parent=1 // pred_fallthru
      _
    %978 = vsyncpa [#allocation3], 1

</llo_original>
